<compile_context>
chip_gen: v7x
topology: tpu7x:2x2x1
jax: 0.10.0
libtpu: 0.0.40
codegen_flags: <defaults>
</compile_context>

<pallas_src>
import functools

import jax
import jax.numpy as jnp
from jax.experimental import pallas as pl
from jax.experimental.pallas import tpu as pltpu

LATENT = 32
FEAT = 256 * 14 * 14  # 50176


# ---------------------------------------------------------------------------
# Pallas kernel: batched tiled matmul with fused bias + optional ReLU
# ---------------------------------------------------------------------------

def _matmul_bias_kernel(a_ref, b_ref, bias_ref, o_ref, *, relu, nk):
    """O[b] = A[b] @ B + bias (+ ReLU).  Grid = (B, M/tm, N/tn, K/tk).

    bf16 operands on the MXU, f32 accumulation.  nk == 1: single-shot epilogue.
    nk > 1: the resident f32 output block is the accumulator across k.
    """
    if nk == 1:
        acc = jnp.dot(a_ref[...], b_ref[...], preferred_element_type=jnp.float32)
        out = acc + bias_ref[...]
        if relu:
            out = jnp.maximum(out, 0.0)
        o_ref[...] = out.astype(o_ref.dtype)
    else:
        k = pl.program_id(3)

        @pl.when(k == 0)
        def _():
            o_ref[...] = jnp.zeros_like(o_ref)

        o_ref[...] += jnp.dot(a_ref[...], b_ref[...],
                              preferred_element_type=jnp.float32)

        @pl.when(k == nk - 1)
        def _():
            out = o_ref[...] + bias_ref[...]
            if relu:
                out = jnp.maximum(out, 0.0)
            o_ref[...] = out


def _largest_divisor_tile(dim, cap, quantum):
    """dim if dim <= cap, else the largest multiple of `quantum` <= cap that
    divides dim exactly; falls back to dim (single full-dim block)."""
    if dim <= cap:
        return dim
    t = cap - cap % quantum
    while t >= quantum:
        if dim % t == 0:
            return t
        t -= quantum
    return dim


def matmul_bias(a, b, bias, *, relu, out_dtype):
    """(B, M, K) @ (K, N) + bias(1, N), fused ReLU.  No runtime padding."""
    B, M, K = a.shape
    Kb, N = b.shape
    assert Kb == K, (Kb, K)
    assert bias.shape == (1, N)
    assert b.dtype == jnp.bfloat16 and bias.dtype == jnp.float32
    a = a.astype(jnp.bfloat16)  # no-op for already-bf16 activations

    # K: full-dim block when it fits, else an exact multiple-of-128 divisor.
    tk = _largest_divisor_tile(K, 8192, 128)
    nk = K // tk
    assert K % tk == 0
    if nk > 1:
        assert out_dtype == jnp.float32  # output block is the f32 accumulator

    # N: full-dim block when it fits, else an exact multiple-of-128 divisor.
    tn = _largest_divisor_tile(N, 8192, 128)
    assert N % tn == 0
    nn = N // tn

    # M: grow blocks until the A block is ~2 MiB; exact divisor or full dim.
    tm_cap = (2 * 1024 * 1024) // max(2 * K, 1)
    tm_cap = max(256, min(8192, tm_cap))
    tm_cap -= tm_cap % 8
    tm = _largest_divisor_tile(M, tm_cap, 8)
    assert M % tm == 0
    nm = M // tm

    grid = (B, nm, nn, nk)
    out_bytes = jnp.dtype(out_dtype).itemsize
    vmem_bytes = 2 * (tm * tk * 2 + tk * tn * 2 + tn * 4 + tm * tn * out_bytes)
    vmem_bytes = max(int(vmem_bytes) + (1 << 20), 32 * 1024 * 1024)

    return pl.pallas_call(
        functools.partial(_matmul_bias_kernel, relu=relu, nk=nk),
        out_shape=jax.ShapeDtypeStruct((B, M, N), out_dtype),
        grid_spec=pltpu.PrefetchScalarGridSpec(
            num_scalar_prefetch=0,
            grid=grid,
            in_specs=[
                pl.BlockSpec((None, tm, tk), lambda bb, i, j, k: (bb, i, k)),
                pl.BlockSpec((tk, tn), lambda bb, i, j, k: (k, j)),
                pl.BlockSpec((1, tn), lambda bb, i, j, k: (0, j)),
            ],
            out_specs=pl.BlockSpec((None, tm, tn), lambda bb, i, j, k: (bb, i, j)),
        ),
        compiler_params=pltpu.CompilerParams(
            dimension_semantics=("parallel", "parallel", "parallel", "arbitrary"),
            vmem_limit_bytes=vmem_bytes,
        ),
    )(a, b, bias)


# ---------------------------------------------------------------------------
# NHWC im2col (XLA data movement) + conv / phase-decomposed conv-transpose
# ---------------------------------------------------------------------------

def _im2col_nhwc(xp, kh, kw, stride):
    """xp: (B, Hp, Wp, C) pre-padded -> (B, Ho*Wo, kh*kw*C); K-order (i, j, c)."""
    B, Hp, Wp, C = xp.shape
    Ho = (Hp - kh) // stride + 1
    Wo = (Wp - kw) // stride + 1
    cols = []
    for i in range(kh):
        for j in range(kw):
            cols.append(xp[:, i:i + stride * (Ho - 1) + 1:stride,
                           j:j + stride * (Wo - 1) + 1:stride, :])
    patches = jnp.concatenate(cols, axis=-1)
    return patches.reshape(B, Ho * Wo, kh * kw * C), Ho, Wo


def conv2d_nhwc(x, wmat, bias, *, relu, out_dtype=jnp.bfloat16):
    """Conv2d(k=4, s=2, p=1) on NHWC; wmat is (48C? no: 16*Cin, OC), rows (i,j,c)."""
    B = x.shape[0]
    xp = jnp.pad(x, ((0, 0), (1, 1), (1, 1), (0, 0)))
    a, Ho, Wo = _im2col_nhwc(xp, 4, 4, 2)
    out = matmul_bias(a, wmat, bias, relu=relu, out_dtype=out_dtype)
    return out.reshape(B, Ho, Wo, wmat.shape[1])


def conv_transpose2d_nhwc(x, wmat, bias, *, relu, out_dtype=jnp.bfloat16):
    """ConvTranspose2d(k=4, s=2, p=1) via 4 output-parity 2x2 sub-convolutions.

    wmat: (4*Cin, 4*Cout); column group g = q*2 + s holds the sub-kernel for
    output parity (ph, pw) = (1-q, 1-s), so a single reshape/transpose/crop
    interleaves the phases into the (2H, 2W) output.
    """
    B, H, W, _ = x.shape
    Cout = wmat.shape[1] // 4
    xp = jnp.pad(x, ((0, 0), (1, 1), (1, 1), (0, 0)))
    a, Hq, Wq = _im2col_nhwc(xp, 2, 2, 1)            # Hq = H + 1, Wq = W + 1
    out = matmul_bias(a, wmat, bias, relu=relu, out_dtype=out_dtype)
    out = out.reshape(B, Hq, Wq, 2, 2, Cout)
    out = jnp.transpose(out, (0, 1, 3, 2, 4, 5)).reshape(B, 2 * Hq, 2 * Wq, Cout)
    return out[:, 1:2 * H + 1, 1:2 * W + 1, :]


# ---------------------------------------------------------------------------
# Parameters: synthetic init in PyTorch layouts + one-time matmul re-layout
# ---------------------------------------------------------------------------

def _uniform(key, shape, fan_in):
    bound = 1.0 / jnp.sqrt(jnp.float32(fan_in))
    return jax.random.uniform(key, shape, jnp.float32, -bound, bound)


def init_params(key):
    ks = jax.random.split(key, 22)
    p = {}
    enc = [(32, 3), (64, 32), (128, 64), (256, 128)]        # Conv2d: (OC, IC, 4, 4)
    for idx, (oc, ic) in enumerate(enc, start=1):
        fan = ic * 16
        p[f"ec{idx}w"] = _uniform(ks[2 * idx - 2], (oc, ic, 4, 4), fan)
        p[f"ec{idx}b"] = _uniform(ks[2 * idx - 1], (oc,), fan)
    p["fcmu_w"] = _uniform(ks[8], (FEAT, LATENT), FEAT)      # (in, out)
    p["fcmu_b"] = _uniform(ks[9], (LATENT,), FEAT)
    p["fclv_w"] = _uniform(ks[10], (FEAT, LATENT), FEAT)
    p["fclv_b"] = _uniform(ks[11], (LATENT,), FEAT)
    p["dfc_w"] = _uniform(ks[12], (LATENT, FEAT), LATENT)    # (in, out)
    p["dfc_b"] = _uniform(ks[13], (FEAT,), LATENT)
    dec = [(256, 128), (128, 64), (64, 32), (32, 3)]         # ConvT: (Cin, Cout, 4, 4)
    for idx, (ci, co) in enumerate(dec, start=1):
        fan = ci * 16
        p[f"dc{idx}w"] = _uniform(ks[12 + 2 * idx], (ci, co, 4, 4), fan)
        p[f"dc{idx}b"] = _uniform(ks[13 + 2 * idx], (co,), fan)
    return p


def _conv_weight_mat(w):
    # (OC, Cin, kh, kw) -> (kh*kw*Cin, OC); rows ordered (i, j, c).
    OC, C, kh, kw = w.shape
    return jnp.transpose(w, (2, 3, 1, 0)).reshape(kh * kw * C, OC)


def _convT_phase_weight(w):
    # (Cin, Cout, 4, 4) -> (4*Cin, 4*Cout).  Column group g = q*2 + s is the
    # 2x2 sub-kernel for output parity (ph, pw) = (1-q, 1-s); within a group
    # rows are ordered (dh, dw, ci) to match the 2x2 im2col, with kernel index
    # (3 - ph - 2*dh, 3 - pw - 2*dw).
    Cin, Cout = w.shape[0], w.shape[1]
    groups = []
    for q in range(2):
        ph = 1 - q
        for s in range(2):
            pw = 1 - s
            taps = [w[:, :, 3 - ph - 2 * dh, 3 - pw - 2 * dw]
                    for dh in range(2) for dw in range(2)]
            groups.append(jnp.concatenate(taps, axis=0))     # (4*Cin, Cout)
    return jnp.concatenate(groups, axis=1)


def _chw_to_hwc_rows(w):
    # fc weight rows indexed by PyTorch flatten order (c, h, w) -> our (h, w, c).
    return w.reshape(256, 14, 14, -1).transpose(1, 2, 0, 3).reshape(FEAT, -1)


def prepare_params(p):
    """One-time re-layout of PyTorch-style params into matmul-ready bf16 mats."""
    q = {}
    for i in range(1, 5):
        q[f"ec{i}w"] = _conv_weight_mat(p[f"ec{i}w"]).astype(jnp.bfloat16)
        q[f"ec{i}b"] = p[f"ec{i}b"].astype(jnp.float32).reshape(1, -1)
    # fused fc_mu / fc_logvar weight: (FEAT, 2*LATENT)
    fc_w = jnp.concatenate([_chw_to_hwc_rows(p["fcmu_w"]),
                            _chw_to_hwc_rows(p["fclv_w"])], axis=1)
    q["fc_w"] = fc_w.astype(jnp.bfloat16)
    q["fc_b"] = (jnp.concatenate([p["fcmu_b"], p["fclv_b"]])
                 .astype(jnp.float32).reshape(1, -1))
    # dec_fc: reorder output columns (c,h,w) -> (h,w,c) so the result is NHWC.
    dfc_w = p["dfc_w"].reshape(LATENT, 256, 14, 14).transpose(0, 2, 3, 1)
    q["dfc_w"] = dfc_w.reshape(LATENT, FEAT).astype(jnp.bfloat16)
    q["dfc_b"] = (p["dfc_b"].reshape(256, 14, 14).transpose(1, 2, 0)
                  .reshape(1, FEAT).astype(jnp.float32))
    for i in range(1, 5):
        q[f"dc{i}w"] = _convT_phase_weight(p[f"dc{i}w"]).astype(jnp.bfloat16)
        q[f"dc{i}b"] = jnp.tile(p[f"dc{i}b"], 4).astype(jnp.float32).reshape(1, -1)
    return q


# ---------------------------------------------------------------------------
# VAE forward
# ---------------------------------------------------------------------------

def vae_forward(prep, x, eps):
    """x: (B, 3, 224, 224) NCHW f32.  Returns (recon NCHW f32, mu, logvar)."""
    B = x.shape[0]
    bf16 = jnp.bfloat16
    # ---- encode (NHWC, bf16 activations) ----
    h = jnp.transpose(x, (0, 2, 3, 1)).astype(bf16)
    h = conv2d_nhwc(h, prep["ec1w"], prep["ec1b"], relu=True)     # (B,112,112,32)
    h = conv2d_nhwc(h, prep["ec2w"], prep["ec2b"], relu=True)     # (B, 56, 56,64)
    h = conv2d_nhwc(h, prep["ec3w"], prep["ec3b"], relu=True)     # (B, 28, 28,128)
    h = conv2d_nhwc(h, prep["ec4w"], prep["ec4b"], relu=True)     # (B, 14, 14,256)
    flat = h.reshape(1, B, FEAT)
    # fused fc_mu / fc_logvar: one matmul, K tiled (tk=7168), f32 accumulator.
    stats = matmul_bias(flat, prep["fc_w"], prep["fc_b"],
                        relu=False, out_dtype=jnp.float32).reshape(B, 2 * LATENT)
    mu, logvar = stats[:, :LATENT], stats[:, LATENT:]
    # ---- reparameterize (tiny (B,32) op; eps supplied by caller, PyTorch uses
    #      torch.randn_like) ----
    z = mu + eps * jnp.exp(0.5 * logvar)
    # ---- decode ----
    d = matmul_bias(z.astype(bf16).reshape(1, B, LATENT), prep["dfc_w"],
                    prep["dfc_b"], relu=True, out_dtype=bf16)
    d = d.reshape(B, 14, 14, 256)
    d = conv_transpose2d_nhwc(d, prep["dc1w"], prep["dc1b"], relu=True)  # 28
    d = conv_transpose2d_nhwc(d, prep["dc2w"], prep["dc2b"], relu=True)  # 56
    d = conv_transpose2d_nhwc(d, prep["dc3w"], prep["dc3b"], relu=True)  # 112
    d = conv_transpose2d_nhwc(d, prep["dc4w"], prep["dc4b"], relu=True)  # 224, bf16
    recon = jnp.transpose(d, (0, 3, 1, 2)).astype(jnp.float32)           # NCHW f32
    return recon, mu, logvar


# ---------------------------------------------------------------------------
# Small numerical self-checks against lax conv references
# ---------------------------------------------------------------------------

def _check_conv_small():
    kx, kw, kb = jax.random.split(jax.random.PRNGKey(1), 3)
    B, H, W, Cin, Cout = 2, 8, 8, 3, 16
    x = jax.random.normal(kx, (B, H, W, Cin), jnp.float32)
    w_pt = jax.random.normal(kw, (Cout, Cin, 4, 4), jnp.float32) * 0.1
    bias = jax.random.normal(kb, (Cout,), jnp.float32) * 0.1
    out = conv2d_nhwc(x.astype(jnp.bfloat16),
                      _conv_weight_mat(w_pt).astype(jnp.bfloat16),
                      bias.reshape(1, -1), relu=True, out_dtype=jnp.float32)
    ref = jax.lax.conv_general_dilated(
        x, jnp.transpose(w_pt, (2, 3, 1, 0)), window_strides=(2, 2),
        padding=[(1, 1), (1, 1)], dimension_numbers=("NHWC", "HWIO", "NHWC"))
    ref = jnp.maximum(ref + bias, 0.0)
    err = float(jnp.max(jnp.abs(out - ref)))
    assert out.shape == ref.shape and err < 0.06, f"conv mismatch: {err}"


def _check_convT_small():
    kx, kw, kb = jax.random.split(jax.random.PRNGKey(2), 3)
    B, H, W, Cin, Cout = 2, 6, 6, 8, 16
    x = jax.random.normal(kx, (B, H, W, Cin), jnp.float32)
    w_pt = jax.random.normal(kw, (Cin, Cout, 4, 4), jnp.float32) * 0.1
    bias = jax.random.normal(kb, (Cout,), jnp.float32) * 0.1
    out = conv_transpose2d_nhwc(x.astype(jnp.bfloat16),
                                _convT_phase_weight(w_pt).astype(jnp.bfloat16),
                                jnp.tile(bias, 4).reshape(1, -1),
                                relu=True, out_dtype=jnp.float32)
    # ConvTranspose2d(k=4, s=2, p=1) == input-dilated conv with flipped kernel.
    w_ref = jnp.transpose(w_pt[:, :, ::-1, ::-1], (2, 3, 0, 1))   # HWIO, flipped
    ref = jax.lax.conv_general_dilated(
        x, w_ref, window_strides=(1, 1), padding=[(2, 2), (2, 2)],
        lhs_dilation=(2, 2), dimension_numbers=("NHWC", "HWIO", "NHWC"))
    ref = jnp.maximum(ref + bias, 0.0)
    err = float(jnp.max(jnp.abs(out - ref)))
    assert out.shape == ref.shape and err < 0.06, f"convT mismatch: {err}"


# ---------------------------------------------------------------------------

if __name__ == "__main__":
    _check_conv_small()
    _check_convT_small()

    key = jax.random.PRNGKey(0)
    k_par, k_x, k_eps = jax.random.split(key, 3)

    batch = 2
    # fc_mu expects 256*14*14 features -> input spatial must be 224 (14 * 2^4).
    x = jax.random.normal(k_x, (batch, 3, 224, 224), jnp.float32)
    eps = jax.random.normal(k_eps, (batch, LATENT), jnp.float32)

    params = init_params(k_par)
    prep = prepare_params(params)     # one-time weight re-layout / bf16 cast

    fwd = jax.jit(vae_forward)
    recon, mu, logvar = fwd(prep, x, eps)
    jax.block_until_ready((recon, mu, logvar))

    assert recon.shape == (batch, 3, 224, 224)
    assert mu.shape == (batch, LATENT) and logvar.shape == (batch, LATENT)
    assert bool(jnp.all(jnp.isfinite(recon)))
    assert bool(jnp.all(jnp.isfinite(mu))) and bool(jnp.all(jnp.isfinite(logvar)))
    print("KERNEL_OK")
</pallas_src>

<mosaic_0001>
module attributes {stable_mosaic.version = 11 : i64} {
  func.func @_matmul_bias_kernel(%arg0: i32, %arg1: i32, %arg2: i32, %arg3: i32, %arg4: memref<1x16x48xbf16, #tpu.memory_space<vmem>>, %arg5: memref<48x16xbf16, #tpu.memory_space<vmem>>, %arg6: memref<1x16xf32, #tpu.memory_space<vmem>>, %arg7: memref<1x16x16xf32, #tpu.memory_space<vmem>>) attributes {dimension_semantics = [#tpu.dimension_semantics<parallel>, #tpu.dimension_semantics<parallel>, #tpu.dimension_semantics<parallel>, #tpu.dimension_semantics<arbitrary>], iteration_bounds = array<i64: 2, 1, 1, 1>, scalar_prefetch = 0 : i64, scratch_operands = 0 : i64, tpu.core_type = #tpu.core_type<tc>, window_params = [{transform_indices = @transform_0, window_bounds = array<i64: 1, 16, 48>}, {transform_indices = @transform_1, window_bounds = array<i64: 48, 16>}, {transform_indices = @transform_2, window_bounds = array<i64: 1, 16>}, {transform_indices = @transform_3, window_bounds = array<i64: 1, 16, 16>}]} {
    %c0 = arith.constant 0 : index
    %c0_0 = arith.constant 0 : index
    %c0_1 = arith.constant 0 : index
    %0 = vector.load %arg4[%c0, %c0_0, %c0_1] : memref<1x16x48xbf16, #tpu.memory_space<vmem>>, vector<1x16x48xbf16>
    %1 = vector.shape_cast %0 : vector<1x16x48xbf16> to vector<16x48xbf16>
    %c0_2 = arith.constant 0 : index
    %c0_3 = arith.constant 0 : index
    %2 = vector.load %arg5[%c0_2, %c0_3] : memref<48x16xbf16, #tpu.memory_space<vmem>>, vector<48x16xbf16>
    %cst = arith.constant dense<0.000000e+00> : vector<16x16xf32>
    %3 = tpu.matmul %1, %2, %cst {dimension_numbers = #tpu.dot_dimension_numbers<[1], [0], [0], [1], [0, 0, 1, 1], [], []>} : vector<16x48xbf16>, vector<48x16xbf16>, vector<16x16xf32> -> vector<16x16xf32>
    %c0_4 = arith.constant 0 : index
    %c0_5 = arith.constant 0 : index
    %4 = vector.load %arg6[%c0_4, %c0_5] : memref<1x16xf32, #tpu.memory_space<vmem>>, vector<1x16xf32>
    %5 = vector.broadcast %4 : vector<1x16xf32> to vector<16x16xf32>
    %6 = arith.addf %3, %5 : vector<16x16xf32>
    %cst_6 = arith.constant 0.000000e+00 : f32
    %7 = vector.broadcast %cst_6 : f32 to vector<16x16xf32>
    %8 = arith.maximumf %6, %7 : vector<16x16xf32>
    %c0_7 = arith.constant 0 : index
    %c0_8 = arith.constant 0 : index
    %c0_9 = arith.constant 0 : index
    %9 = vector.load %arg7[%c0_7, %c0_8, %c0_9] : memref<1x16x16xf32, #tpu.memory_space<vmem>>, vector<1x16x16xf32>
    %10 = vector.shape_cast %9 : vector<1x16x16xf32> to vector<16x16xf32>
    %11 = vector.shape_cast %8 : vector<16x16xf32> to vector<1x16x16xf32>
    tpu.vector_store %arg7[%c0_7, %c0_8, %c0_9], %11 {strides = array<i32>} : memref<1x16x16xf32, #tpu.memory_space<vmem>>, vector<1x16x16xf32>,
    return
  }
  func.func @transform_0(%arg0: i32, %arg1: i32, %arg2: i32, %arg3: i32) -> (i32, i32, i32) {
    %c0_i32 = arith.constant 0 : i32
    return %arg0, %arg1, %arg3 : i32, i32, i32
  }
  func.func @transform_1(%arg0: i32, %arg1: i32, %arg2: i32, %arg3: i32) -> (i32, i32) {
    %c0_i32 = arith.constant 0 : i32
    return %arg3, %arg2 : i32, i32
  }
  func.func @transform_2(%arg0: i32, %arg1: i32, %arg2: i32, %arg3: i32) -> (i32, i32) {
    %c0_i32 = arith.constant 0 : i32
    %c0_i32_0 = arith.constant 0 : i32
    return %c0_i32, %arg2 : i32, i32
  }
  func.func @transform_3(%arg0: i32, %arg1: i32, %arg2: i32, %arg3: i32) -> (i32, i32, i32) {
    %c0_i32 = arith.constant 0 : i32
    return %arg0, %arg1, %arg2 : i32, i32, i32
  }
}

</mosaic_0001>

<llo_original>
// kernel: tpu_custom_call.1
$region0: #{tpu_custom_call.1}
  #allocation0 [shape = 'u32[]', space=smem, size = 0x4, offset = 0x4, fixed_abs, tag = 'smem constant byte address 0x4 - core index']
  #allocation1 [shape = 'u32[144,128]{1,0:T(1,128)}', space=vmem, size = 0x12000, scoped, tag = 'internal scratch']
  %s0 = inlined_call_operand.vmem [shape: bf16[2,16,48], index: 0, kind: input, shape index: {}]
  %s1 = inlined_call_operand.vmem [shape: bf16[48,16], index: 1, kind: input, shape index: {}]
  %s2 = inlined_call_operand.vmem [shape: f32[1,16], index: 2, kind: input, shape index: {}]
  %s3 = inlined_call_operand.hbm [shape: f32[2,16,16], index: 3, kind: output, shape index: {}]
  %s4 = sld [smem:[#allocation0]]
  $region45: #{tpu_custom_call.1} parent=0
    _
  %s6 = ssub.s32 1, %s4
  %s7 = scalar_select 0, %s6, %s4
  $region1: #{tpu_custom_call.1} parent=0
    #allocation2 [shape = 'u8[16384]{0}', space=vmem, size = 0x4000, scoped, tag = 'output window, operand 0']
    #allocation3 [shape = 's32[2]{0}', space=sflag, size = 0x8, scoped, tag = 'scoped memory for tpu_custom_call.1']
    %8 = vsyncpa [#allocation3], 0
    %s9 = scalar_lea.sflag [#allocation3], 1
    %10 = vsyncpa %s9, 0
    loop: start=0, step=1, limit=4
    $region2: #{tpu_custom_call.1} parent=1 // loop_pre_header
      _
    $region3: #{tpu_custom_call.1} parent=1 // loop_header
      %s12 = sphi 0, %s16
      %p13 = scmp.ge.s32.totalorder %s12, 4
      %s19 = sphi 0, %s45
      %s20 = sphi 0, %s41
      %s21 = sphi 0, %s37
      %s22 = sphi 0, %s33
      %s23 = sphi 0, %s19
      %s24 = sphi 0, %s20
      %s25 = sphi 0, %s21
      %s26 = sphi 0, %s22
      %s27 = sphi 0, %s23
      %s28 = sphi 0, %s24
      %s29 = sphi 0, %s25
      %s30 = sphi 0, %s26
      %s52 = sphi 0, %s54
      %s55 = sphi 0, %s52
      %s56 = sphi 0, %s55
      %s72 = sphi 0, %s56
      %s80 = sphi 0, %s82
      %s83 = sphi 0, %s80
      %s84 = sphi 0, %s83
      %s100 = sphi 0, %s84
      %s106 = sphi 0, %s108
      %s109 = sphi 0, %s106
      %s110 = sphi 0, %s109
      %s126 = sphi 0, %s110
      %s136 = sphi 0, %s138
      %s139 = sphi 0, %s136
      %s140 = sphi 0, %s139
      %s156 = sphi 0, %s140
    $region4: #{tpu_custom_call.1} parent=1 // loop_header_branch
      %15 = sbr.rel (%p13) target = $region8
    $region5: #{tpu_custom_call.1} parent=1 // loop_body
      %s17 = ssub.s32 %s12, 1
      %s18 = ssub.s32 %s12, 2
      %s31 = sadd.s32 1, %s22
      %p32 = scmp.ge.s32.totalorder %s31, 1
      %s33 = scalar_select %p32, 0, %s31
      %s34 = sadd.s32 1, %s21
      %s35 = scalar_select %p32, %s34, %s21
      %p36 = scmp.ge.s32.totalorder %s35, 1
      %s37 = scalar_select %p36, 0, %s35
      %s38 = sadd.s32 1, %s20
      %s39 = scalar_select %p36, %s38, %s20
      %p40 = scmp.ge.s32.totalorder %s39, 1
      %s41 = scalar_select %p40, 0, %s39
      %s42 = sadd.s32 1, %s19
      %s43 = scalar_select %p40, %s42, %s19
      %p44 = scmp.ge.s32.totalorder %s43, 2
      %s45 = scalar_select %p44, 0, %s43
      %s46 = ssub.s32 %s19, %s45
      %s47 = ssub.s32 %s20, %s41
      %s48 = sor.u32 %s46, %s47
      %s49 = ssub.s32 %s22, %s33
      %s50 = sor.u32 %s48, %s49
      %p51 = scmp.eq.s32.totalorder %s50, 0
      %s53 = sadd.s32 %s52, 1
      %s54 = scalar_select %p51, %s52, %s53
      %p57 = pneg %p51
      %p58 = scmp.eq.s32.totalorder %s12, 1
      %p59 = por %p57, %p58
      %p60 = scmp.ne.s32.totalorder %s52, %s55
      %p61 = scmp.eq.s32.totalorder %s12, 0
      %p62 = por %p60, %p61
      %p63 = scmp.ne.s32.totalorder %s52, %s55
      %p64 = scmp.eq.s32.totalorder %s17, 1
      %p65 = por %p63, %p64
      %p66 = scmp.ne.s32.totalorder %s55, %s56
      %p67 = scmp.eq.s32.totalorder %s17, 0
      %p68 = por %p66, %p67
      %p69 = scmp.ne.s32.totalorder %s55, %s56
      %p70 = scmp.eq.s32.totalorder %s18, 1
      %p71 = por %p69, %p70
      %p73 = scmp.ne.s32.totalorder %s56, %s72
      %p74 = scmp.eq.s32.totalorder %s18, 0
      %p75 = por %p73, %p74
      %s76 = ssub.s32 %s22, %s33
      %s77 = ssub.s32 %s21, %s37
      %s78 = sor.u32 %s76, %s77
      %p79 = scmp.eq.s32.totalorder %s78, 0
      %s81 = sadd.s32 %s80, 1
      %s82 = scalar_select %p79, %s80, %s81
      %p85 = pneg %p79
      %p86 = scmp.eq.s32.totalorder %s12, 1
      %p87 = por %p85, %p86
      %p88 = scmp.ne.s32.totalorder %s80, %s83
      %p89 = scmp.eq.s32.totalorder %s12, 0
      %p90 = por %p88, %p89
      %p91 = scmp.ne.s32.totalorder %s80, %s83
      %p92 = scmp.eq.s32.totalorder %s17, 1
      %p93 = por %p91, %p92
      %p94 = scmp.ne.s32.totalorder %s83, %s84
      %p95 = scmp.eq.s32.totalorder %s17, 0
      %p96 = por %p94, %p95
      %p97 = scmp.ne.s32.totalorder %s83, %s84
      %p98 = scmp.eq.s32.totalorder %s18, 1
      %p99 = por %p97, %p98
      %p101 = scmp.ne.s32.totalorder %s84, %s100
      %p102 = scmp.eq.s32.totalorder %s18, 0
      %p103 = por %p101, %p102
      %s104 = ssub.s32 %s21, %s37
      %p105 = scmp.eq.s32.totalorder %s104, 0
      %s107 = sadd.s32 %s106, 1
      %s108 = scalar_select %p105, %s106, %s107
      %p111 = pneg %p105
      %p112 = scmp.eq.s32.totalorder %s12, 1
      %p113 = por %p111, %p112
      %p114 = scmp.ne.s32.totalorder %s106, %s109
      %p115 = scmp.eq.s32.totalorder %s12, 0
      %p116 = por %p114, %p115
      %p117 = scmp.ne.s32.totalorder %s106, %s109
      %p118 = scmp.eq.s32.totalorder %s17, 1
      %p119 = por %p117, %p118
      %p120 = scmp.ne.s32.totalorder %s109, %s110
      %p121 = scmp.eq.s32.totalorder %s17, 0
      %p122 = por %p120, %p121
      %p123 = scmp.ne.s32.totalorder %s109, %s110
      %p124 = scmp.eq.s32.totalorder %s18, 1
      %p125 = por %p123, %p124
      %p127 = scmp.ne.s32.totalorder %s110, %s126
      %p128 = scmp.eq.s32.totalorder %s18, 0
      %p129 = por %p127, %p128
      %s130 = ssub.s32 %s19, %s45
      %s131 = ssub.s32 %s20, %s41
      %s132 = sor.u32 %s130, %s131
      %s133 = ssub.s32 %s21, %s37
      %s134 = sor.u32 %s132, %s133
      %p135 = scmp.eq.s32.totalorder %s134, 0
      %s137 = sadd.s32 %s136, 1
      %s138 = scalar_select %p135, %s136, %s137
      %p141 = pneg %p135
      %p142 = scmp.eq.s32.totalorder %s12, 1
      %p143 = por %p141, %p142
      %p144 = scmp.ne.s32.totalorder %s136, %s139
      %p145 = scmp.eq.s32.totalorder %s12, 0
      %p146 = por %p144, %p145
      %p147 = scmp.ne.s32.totalorder %s136, %s139
      %p148 = scmp.eq.s32.totalorder %s17, 1
      %p149 = por %p147, %p148
      %p150 = scmp.ne.s32.totalorder %s139, %s140
      %p151 = scmp.eq.s32.totalorder %s17, 0
      %p152 = por %p150, %p151
      %p153 = scmp.ne.s32.totalorder %s139, %s140
      %p154 = scmp.eq.s32.totalorder %s18, 1
      %p155 = por %p153, %p154
      %p157 = scmp.ne.s32.totalorder %s140, %s156
      %p158 = scmp.eq.s32.totalorder %s18, 0
      %p159 = por %p157, %p158
      %p160 = scmp.le.s32.totalorder 1, %s12
      %p161 = scmp.lt.s32.totalorder %s12, 3
      %p162 = pnand %p160, %p161
      %p163 = pneg %p162
      // Predicated region
      $region9: #{tpu_custom_call.1} parent=5 // pred_check
        _
      $region10: #{tpu_custom_call.1} parent=5 // pred_check_branch
        %165 = sbr.rel (%p162) target = $region12
      $region11: #{tpu_custom_call.1} parent=5 // pred_region
        %s166 = ssub.s32 %s12, 1
        // Predicated region
        $region13: #{tpu_custom_call.1} parent=11 // pred_check
          %p167 = pneg %p96
        $region14: #{tpu_custom_call.1} parent=11 // pred_check_branch
          %169 = sbr.rel (%p167) target = $region16
        $region15: #{tpu_custom_call.1} parent=11 // pred_region
          %s170 = smul.u32 6, %s26
          %p171 = scmp.lt.s32.totalorder %s170, 5
          %s172 = scalar_select %p171, %s170, 5
          %p173 = scmp.lt.s32.totalorder %s25, 0
          %s174 = scalar_select %p173, %s25, 0
          %s175 = sadd.s32 %s174, %s172
          %s176 = smul.addr %s175, 4
          %s177 = scalar_lea.vmem %s1, %s176
          %s178 = smul.u32 6, %s26
        $region16: #{tpu_custom_call.1} parent=11 // pred_fallthru
          _
        // Predicated region
        $region17: #{tpu_custom_call.1} parent=11 // pred_check
          %p179 = pneg %p122
        $region18: #{tpu_custom_call.1} parent=11 // pred_check_branch
          %181 = sbr.rel (%p179) target = $region20
        $region19: #{tpu_custom_call.1} parent=11 // pred_region
          %p182 = scmp.lt.s32.totalorder %s25, 0
          %s183 = scalar_select %p182, %s25, 0
          %s184 = scalar_lea.vmem %s2, %s183
        $region20: #{tpu_custom_call.1} parent=11 // pred_fallthru
          _
      $region12: #{tpu_custom_call.1} parent=5 // pred_fallthru
        _
      %p185 = scmp.lt.s32.totalorder %s12, 2
      // Predicated region
      $region21: #{tpu_custom_call.1} parent=5 // pred_check
        %p186 = pneg %p185
      $region22: #{tpu_custom_call.1} parent=5 // pred_check_branch
        %188 = sbr.rel (%p186) target = $region24
      $region23: #{tpu_custom_call.1} parent=5 // pred_region
        // Predicated region
        $region25: #{tpu_custom_call.1} parent=23 // pred_check
          %p189 = pneg %p62
        $region26: #{tpu_custom_call.1} parent=23 // pred_check_branch
          %191 = sbr.rel (%p189) target = $region28
        $region27: #{tpu_custom_call.1} parent=23 // pred_region
          %s192 = smul.u32 2, %s20
          %p193 = scmp.lt.s32.totalorder %s19, 1
          %s194 = scalar_select %p193, %s19, 1
          %p195 = scmp.lt.s32.totalorder %s192, 1
          %s196 = scalar_select %p195, %s192, 1
          %p197 = scmp.lt.s32.totalorder %s22, 0
          %s198 = scalar_select %p197, %s22, 0
          %s199 = sadd.s32 %s198, %s196
          %s200 = smul.addr %s194, 2
          %s201 = sadd.s32 %s199, %s200
          %s202 = smul.addr %s201, 4
          %s203 = scalar_lea.vmem %s0, %s202
          %s204 = smul.u32 2, %s20
        $region28: #{tpu_custom_call.1} parent=23 // pred_fallthru
          _
      $region24: #{tpu_custom_call.1} parent=5 // pred_fallthru
        _
      %p205 = scmp.le.s32.totalorder 1, %s12
      %p206 = scmp.lt.s32.totalorder %s12, 3
      %p207 = pnand %p205, %p206
      %p208 = pneg %p207
      // Predicated region
      $region29: #{tpu_custom_call.1} parent=5 // pred_check
        _
      $region30: #{tpu_custom_call.1} parent=5 // pred_check_branch
        %210 = sbr.rel (%p207) target = $region32
      $region31: #{tpu_custom_call.1} parent=5 // pred_region
        %s211 = ssub.s32 %s12, 1
        %s212 = smul.u32 2, %s24
        %p213 = scmp.lt.s32.totalorder %s23, 1
        %s214 = scalar_select %p213, %s23, 1
        %p215 = scmp.lt.s32.totalorder %s212, 1
        %s216 = scalar_select %p215, %s212, 1
        %p217 = scmp.lt.s32.totalorder %s26, 0
        %s218 = scalar_select %p217, %s26, 0
        %s219 = sadd.s32 %s218, %s216
        %s220 = smul.addr %s214, 2
        %s221 = sadd.s32 %s219, %s220
        %s222 = smul.addr %s221, 4
        %s223 = scalar_lea.vmem %s0, %s222
        %p224 = pneg %p68
        %p225 = pneg %p65
        %s226 = smul.u32 6, %s26
        %p227 = scmp.lt.s32.totalorder %s226, 5
        %s228 = scalar_select %p227, %s226, 5
        %p229 = scmp.lt.s32.totalorder %s25, 0
        %s230 = scalar_select %p229, %s25, 0
        %s231 = sadd.s32 %s230, %s228
        %s232 = smul.addr %s231, 4
        %s233 = scalar_lea.vmem %s1, %s232
        %p234 = pneg %p96
        %p235 = pneg %p93
        %p236 = scmp.lt.s32.totalorder %s25, 0
        %s237 = scalar_select %p236, %s25, 0
        %s238 = scalar_lea.vmem %s2, %s237
        %p239 = pneg %p122
        %p240 = pneg %p119
        %p241 = pneg %p152
        %p242 = pneg %p149
        %s243 = sand.u32 %s139, 1
        %s244 = scalar_lea.sflag [#allocation3], %s243
        %s245 = sand.u32 %s139, 1
        %s246 = smul.addr %s245, 16
        %s247 = scalar_lea.vmem [#allocation2], %s246
        %s248 = smul.u32 2, %s24
        %p249 = scmp.lt.s32.totalorder %s23, 1
        %s250 = scalar_select %p249, %s23, 1
        %p251 = scmp.lt.s32.totalorder %s248, 1
        %s252 = scalar_select %p251, %s248, 1
        %p253 = scmp.lt.s32.totalorder %s26, 0
        %s254 = scalar_select %p253, %s26, 0
        %s255 = sadd.s32 %s254, %s252
        %s256 = smul.addr %s250, 2
        %s257 = sadd.s32 %s255, %s256
        %s258 = smul.addr %s257, 4
        %s259 = scalar_lea.vmem %s0, %s258
        %s260 = smul.u32 2, %s24
        %s261 = smul.u32 6, %s26
        %p262 = scmp.lt.s32.totalorder %s261, 5
        %s263 = scalar_select %p262, %s261, 5
        %p264 = scmp.lt.s32.totalorder %s25, 0
        %s265 = scalar_select %p264, %s25, 0
        %s266 = sadd.s32 %s265, %s263
        %s267 = smul.addr %s266, 4
        %s268 = scalar_lea.vmem %s1, %s267
        %s269 = smul.u32 6, %s26
        %p270 = scmp.lt.s32.totalorder %s25, 0
        %s271 = scalar_select %p270, %s25, 0
        %s272 = scalar_lea.vmem %s2, %s271
        %s273 = smul.u32 2, %s24
        %v275 = vld [vmem:[%s259] sm:$0xf]
        %v276 = vld [vmem:[%s259 + $0x4] sm:$0xf]
        %v277 = vld [vmem:[%s268] sm:$0xf]
        %v278 = vld [vmem:[%s268 + $0x4] sm:$0xf]
        %v279 = vld [vmem:[%s268 + $0x8] sm:$0xf]
        %v280 = vld [vmem:[%s268 + $0xc] sm:$0xf]
        %v281 = vld [vmem:[%s268 + $0x10] sm:$0xf]
        %v282 = vld [vmem:[%s268 + $0x14] sm:$0xf]
        %v283 = vld [vmem:[%s272] sm:$0x1]
        %v285 = vlaneseq
        %v286 = vshrl.u32 %v285, 7
        %v287 = vsub.s32 0, %v286
        %v288 = vrot.slane %v283, %v287
        %v292 = vunpack.c.l.b16 %v275
        %v293 = vunpack.c.l.b16 %v276
        %v294 = vpack.c.b16 %v293, %v292
        %v301 = vunpack.c.l.b16 %v277
        %v302 = vunpack.c.l.b16 %v278
        %v303 = vunpack.c.l.b16 %v279
        %v304 = vunpack.c.l.b16 %v280
        %v305 = vunpack.c.l.b16 %v281
        %v306 = vunpack.c.l.b16 %v282
        %v307 = vpack.c.b16 %v302, %v301
        %v308 = vpack.c.b16 %v304, %v303
        %v309 = vpack.c.b16 %v306, %v305
        %vm313 = vcmask 392192
        %v315 = vsel %vm313, %v294, 0
        %317 = vmatprep.subr.bf16.mxu0 0
        %318 = vmatpush1.bf16.msra.mxu0 %v307
        %319 = vmatprep.subr.bf16.mxu0 0
        %320 = vmatpush1.bf16.msra.mxu0 %v308
        %321 = vmatprep.subr.bf16.mxu0 0
        %322 = vmatpush1.bf16.msra.mxu0 %v309
        %323 = vmatprep.subr.bf16.mxu0 0
        %324 = vmatpush1.bf16.msra.mxu0 0
        %325 = vmatprep.subr.bf16.mxu0 0
        %326 = vmatpush1.bf16.msra.mxu0 0
        %327 = vmatprep.subr.bf16.mxu0 0
        %328 = vmatpush1.bf16.msra.mxu0 0
        %329 = vmatprep.subr.bf16.mxu0 0
        %330 = vmatpush1.bf16.msra.mxu0 0
        %331 = vmatprep.subr.bf16.mxu0 0
        %332 = vmatpush1.bf16.msra.mxu0 0
        %333 = vmatprep.subr.bf16.mxu0 0
        %334 = vmatpush1.bf16.msra.mxu0 0
        %335 = vmatprep.subr.bf16.mxu0 0
        %336 = vmatpush1.bf16.msra.mxu0 0
        %337 = vmatprep.subr.bf16.mxu0 0
        %338 = vmatpush1.bf16.msra.mxu0 0
        %339 = vmatprep.subr.bf16.mxu0 0
        %340 = vmatpush1.bf16.msra.mxu0 0
        %341 = vmatprep.subr.bf16.mxu0 0
        %342 = vmatpush1.bf16.msra.mxu0 0
        %343 = vmatprep.subr.bf16.mxu0 0
        %344 = vmatpush1.bf16.msra.mxu0 0
        %345 = vmatprep.subr.bf16.mxu0 0
        %346 = vmatpush1.bf16.msra.mxu0 0
        %347 = vmatprep.subr.bf16.mxu0 0
        %348 = vmatpush1.bf16.msra.mxu0 0
        %349 = vmatprep.mubr.bf16.mxu0 0
        %350 = vmatmul.mubr.bf16.gmra.mrb[0].mxu0 %v315
        %v351 = vpop.f32.mrb[0].mxu0
        %v352 = vadd.f32 %v288, %v351
        %v353 = vpop.f32.mrb[0].mxu0
        %v354 = vpop.f32.mrb[0].mxu0
        %v355 = vadd.f32 %v288, %v354
        %v356 = vpop.f32.mrb[0].mxu0
        %357 = vdwg.mxu0
        %v358 = vmax.f32 %v352, 0.0
        %v359 = vmax.f32 %v355, 0.0
        %vm360 = vcmask 130048
        %361 = vst.msk [vmem:[%s247] sm:$0xff] %vm360, %v358
        %362 = vst.msk [vmem:[%s247 + $0x8] sm:$0xff] %vm360, %v359
        %s363 = sand.u32 %s139, 1
        %s364 = scalar_lea.sflag [#allocation3], %s363
        %s365 = sand.u32 %s139, 1
        %s366 = smul.addr %s365, 16
        %s367 = scalar_lea.vmem [#allocation2], %s366
        // Predicated region
        $region33: #{tpu_custom_call.1} parent=31 // pred_check
          %p368 = pneg %p149
        $region34: #{tpu_custom_call.1} parent=31 // pred_check_branch
          %370 = sbr.rel (%p368) target = $region36
        $region35: #{tpu_custom_call.1} parent=31 // pred_region
          %s371 = smul.u32 2, %s24
          %s373 = ssub.s32 256, 256
          %374 = vsyncadd %s364, %s373
          %s375 = sadd.s32 %s25, %s371
          %s376 = smul.addr %s23, 2
          %s377 = sadd.s32 %s375, %s376
          %s378 = smul.addr %s377, 128
          %s379 = scalar_lea.hbm %s3, %s378
          %s380 = sshll.u32 %s367, 4
          %s381 = int_to_ptr.vmem [resolvable:$true] %s380
          %386 = dma.vmem_to_hbm [thread:$0]  %s381, 256, %s379, %s364, 128, 128, 8
        $region36: #{tpu_custom_call.1} parent=31 // pred_fallthru
          _
      $region32: #{tpu_custom_call.1} parent=5 // pred_fallthru
        _
      %p387 = scmp.le.s32.totalorder 2, %s12
      // Predicated region
      $region37: #{tpu_custom_call.1} parent=5 // pred_check
        %p388 = pneg %p387
      $region38: #{tpu_custom_call.1} parent=5 // pred_check_branch
        %390 = sbr.rel (%p388) target = $region40
      $region39: #{tpu_custom_call.1} parent=5 // pred_region
        %s391 = ssub.s32 %s12, 2
        // Predicated region
        $region41: #{tpu_custom_call.1} parent=39 // pred_check
          %p392 = pneg %p155
        $region42: #{tpu_custom_call.1} parent=39 // pred_check_branch
          %394 = sbr.rel (%p392) target = $region44
        $region43: #{tpu_custom_call.1} parent=39 // pred_region
          %s395 = sand.u32 %s140, 1
          %s396 = scalar_lea.sflag [#allocation3], %s395
          %s397 = sand.u32 %s140, 1
          %s398 = smul.addr %s397, 16
          %s399 = scalar_lea.vmem [#allocation2], %s398
          %400 = dma.done %s396, 256
        $region44: #{tpu_custom_call.1} parent=39 // pred_fallthru
          _
      $region40: #{tpu_custom_call.1} parent=5 // pred_fallthru
        _
    $region6: #{tpu_custom_call.1} parent=1 // loop_footer
      %s16 = sadd.s32 1, %s12
    $region7: #{tpu_custom_call.1} parent=1 // loop_footer_branch
      %11 = sbr.rel target = $region3
    $region8: #{tpu_custom_call.1} parent=1 // loop_exit
      _
    %401 = vsyncpa [#allocation3], 1
    %s402 = scalar_lea.sflag [#allocation3], 1
    %403 = vsyncpa %s402, 1

</llo_original>
